<compile_context>
chip_gen: v6e
topology: v6e:2x2x1
jax: 0.10.0
libtpu: 0.0.40
codegen_flags: <defaults>
</compile_context>

<pallas_src>
import math
import functools

import jax
import jax.numpy as jnp
from jax.experimental import pallas as pl
from jax.experimental.pallas import tpu as pltpu


def _pick_tile(s, cap):
    """Largest power-of-two tile <= cap that divides s; falls back to full s."""
    for t in (1024, 512, 256, 128, 64, 32, 16, 8):
        if t <= cap and t <= s and s % t == 0:
            return t
    return s


# --------------------------------------------------------------------------
# Kernel 1: fused QKV projection -> head-major bf16 layout, Q pre-scaled.
# --------------------------------------------------------------------------
def _qkv_proj_kernel(x_ref, wq_ref, bq_ref, wk_ref, bk_ref, wv_ref, bv_ref,
                     q_ref, k_ref, v_ref, *, num_heads, head_size):
    x = x_ref[0].astype(jnp.bfloat16)                       # (Ts, D_in)
    inv_sqrt_dh = 1.0 / math.sqrt(head_size)

    # bf16 MXU operands, f32 accumulation; bias add in f32.
    q = jnp.dot(x, wq_ref[...], preferred_element_type=jnp.float32) + bq_ref[...]
    k = jnp.dot(x, wk_ref[...], preferred_element_type=jnp.float32) + bk_ref[...]
    v = jnp.dot(x, wv_ref[...], preferred_element_type=jnp.float32) + bv_ref[...]
    q = q * inv_sqrt_dh     # fold softmax scale into Q (saves S*S VPU multiplies later)

    # Store head-major (num_heads, Ts, head_size) so the attention kernel can run
    # head-batched matmuls with both operands contracted on their lane dim.
    for h in range(num_heads):
        sl = slice(h * head_size, (h + 1) * head_size)
        q_ref[0, h] = q[:, sl].astype(q_ref.dtype)
        k_ref[0, h] = k[:, sl].astype(k_ref.dtype)
        v_ref[0, h] = v[:, sl].astype(v_ref.dtype)


# --------------------------------------------------------------------------
# Kernel 2: flash attention (online softmax over KV tiles) + dense + LayerNorm.
# --------------------------------------------------------------------------
def _flash_attn_out_kernel(q_ref, k_ref, v_ref, wd_ref, bd_ref, g_ref, b_ref,
                           o_ref, m_sc, l_sc, acc_sc,
                           *, num_heads, head_size, eps):
    kv = pl.program_id(2)

    @pl.when(kv == 0)
    def _init():
        m_sc[...] = jnp.full(m_sc.shape, -jnp.inf, dtype=m_sc.dtype)
        l_sc[...] = jnp.zeros(l_sc.shape, dtype=l_sc.dtype)
        acc_sc[...] = jnp.zeros(acc_sc.shape, dtype=acc_sc.dtype)

    q = q_ref[0]            # (nh, Tq, dh) bf16, already scaled by 1/sqrt(dh)
    k = k_ref[0]            # (nh, Tk, dh) bf16
    v = v_ref[0]            # (nh, Tk, dh) bf16

    # scores[h, q, k]: contract both operands on their last (lane) dim — no K.T.
    s = jnp.einsum("hqd,hkd->hqk", q, k, preferred_element_type=jnp.float32)

    m_prev = m_sc[...]                                          # (nh, Tq, 1)
    m_new = jnp.maximum(m_prev, jnp.max(s, axis=-1, keepdims=True))
    alpha = jnp.exp(m_prev - m_new)                             # rescale of old state
    p = jnp.exp(s - m_new)                                      # (nh, Tq, Tk) f32

    l_sc[...] = alpha * l_sc[...] + jnp.sum(p, axis=-1, keepdims=True)
    acc_sc[...] = alpha * acc_sc[...] + jnp.einsum(
        "hqk,hkd->hqd", p.astype(v.dtype), v, preferred_element_type=jnp.float32)
    m_sc[...] = m_new

    @pl.when(kv == pl.num_programs(2) - 1)
    def _finalize():
        tq = q_ref.shape[2]
        hidden_size = num_heads * head_size

        inv_l = pl.reciprocal(l_sc[...], approx=True)           # EUP reciprocal
        ctx = acc_sc[...] * inv_l                               # (nh, Tq, dh) f32

        # Dense projection without concatenating narrow per-head slices:
        #   hidden = sum_h ctx_h @ Wd[h*dh:(h+1)*dh, :]   (cheap sublane slices of Wd)
        hidden = jnp.zeros((tq, hidden_size), jnp.float32)
        for h in range(num_heads):
            w_h = wd_ref[h * head_size:(h + 1) * head_size, :]  # (dh, H) bf16
            hidden = hidden + jnp.dot(ctx[h].astype(w_h.dtype), w_h,
                                      preferred_element_type=jnp.float32)
        hidden = hidden + bd_ref[...]                           # (Tq, H) f32

        # TF-style LayerNorm (eps inside the sqrt), biased variance, f32 math.
        u = jnp.mean(hidden, axis=-1, keepdims=True)
        d = hidden - u
        var = jnp.mean(d * d, axis=-1, keepdims=True)
        normed = d * jax.lax.rsqrt(var + eps)                   # EUP rsqrt
        out = g_ref[...] * normed + b_ref[...]

        o_ref[0] = out.astype(o_ref.dtype)


# --------------------------------------------------------------------------
# Wrapper
# --------------------------------------------------------------------------
def self_attention(x, params, *, num_heads, eps=1e-12,
                   block_q=256, block_kv=256, block_seq=256):
    """x: (B, S, D_in) f32.  Linear weights stored as (in, out).  Returns (B, S, H)."""
    B, S, D_in = x.shape
    wq, bq, wk, bk, wv, bv, wd, bd, gamma, beta = params
    H = wq.shape[1]
    assert H % num_heads == 0
    dh = H // num_heads

    ts = _pick_tile(S, block_seq)
    tq = _pick_tile(S, block_q)
    tkv = _pick_tile(S, block_kv)

    # bf16 MXU operands (accumulation stays f32 inside the kernels).
    wq_b = wq.astype(jnp.bfloat16)
    wk_b = wk.astype(jnp.bfloat16)
    wv_b = wv.astype(jnp.bfloat16)
    wd_b = wd.astype(jnp.bfloat16)
    # biases / LN params as (1, H) f32 rows.
    bq2 = bq.reshape(1, H).astype(jnp.float32)
    bk2 = bk.reshape(1, H).astype(jnp.float32)
    bv2 = bv.reshape(1, H).astype(jnp.float32)
    bd2 = bd.reshape(1, H).astype(jnp.float32)
    g2 = gamma.reshape(1, H).astype(jnp.float32)
    b2 = beta.reshape(1, H).astype(jnp.float32)

    # Explicit scoped-VMEM budget: above the 32 MiB default, below v7x's 64 MiB physical.
    vmem_limit = 48 * 1024 * 1024

    # ---- Kernel 1: QKV projection -> (B, nh, S, dh) bf16, Q pre-scaled ----
    const2 = lambda shape: pl.BlockSpec(shape, lambda b, si: (0,) * len(shape))
    qkv_shape = jax.ShapeDtypeStruct((B, num_heads, S, dh), jnp.bfloat16)
    qkv_spec = pl.BlockSpec((1, num_heads, ts, dh), lambda b, si: (b, 0, si, 0))

    q_hm, k_hm, v_hm = pl.pallas_call(
        functools.partial(_qkv_proj_kernel, num_heads=num_heads, head_size=dh),
        out_shape=(qkv_shape, qkv_shape, qkv_shape),
        grid_spec=pltpu.PrefetchScalarGridSpec(
            num_scalar_prefetch=0,
            grid=(B, S // ts),
            in_specs=[
                pl.BlockSpec((1, ts, D_in), lambda b, si: (b, si, 0)),
                const2((D_in, H)), const2((1, H)),
                const2((D_in, H)), const2((1, H)),
                const2((D_in, H)), const2((1, H)),
            ],
            out_specs=(qkv_spec, qkv_spec, qkv_spec),
        ),
        compiler_params=pltpu.CompilerParams(
            dimension_semantics=("parallel", "parallel"),
            vmem_limit_bytes=vmem_limit,
        ),
        cost_estimate=pl.CostEstimate(
            flops=2 * B * S * D_in * 3 * H,
            transcendentals=0,
            bytes_accessed=B * S * D_in * 4 + 3 * D_in * H * 2 + 3 * B * S * H * 2 + 6 * H * 4,
        ),
    )(x, wq_b, bq2, wk_b, bk2, wv_b, bv2)

    # ---- Kernel 2: flash attention + dense + LayerNorm ----
    const3 = lambda shape: pl.BlockSpec(shape, lambda b, qi, ki: (0,) * len(shape))

    out = pl.pallas_call(
        functools.partial(_flash_attn_out_kernel,
                          num_heads=num_heads, head_size=dh, eps=eps),
        out_shape=jax.ShapeDtypeStruct((B, S, H), x.dtype),
        grid_spec=pltpu.PrefetchScalarGridSpec(
            num_scalar_prefetch=0,
            grid=(B, S // tq, S // tkv),
            in_specs=[
                pl.BlockSpec((1, num_heads, tq, dh), lambda b, qi, ki: (b, 0, qi, 0)),
                pl.BlockSpec((1, num_heads, tkv, dh), lambda b, qi, ki: (b, 0, ki, 0)),
                pl.BlockSpec((1, num_heads, tkv, dh), lambda b, qi, ki: (b, 0, ki, 0)),
                const3((H, H)), const3((1, H)),
                const3((1, H)), const3((1, H)),
            ],
            out_specs=pl.BlockSpec((1, tq, H), lambda b, qi, ki: (b, qi, 0)),
            scratch_shapes=[
                pltpu.VMEM((num_heads, tq, 1), jnp.float32),    # running max
                pltpu.VMEM((num_heads, tq, 1), jnp.float32),    # running sum
                pltpu.VMEM((num_heads, tq, dh), jnp.float32),   # context accumulator
            ],
        ),
        compiler_params=pltpu.CompilerParams(
            dimension_semantics=("parallel", "parallel", "arbitrary"),
            vmem_limit_bytes=vmem_limit,
        ),
        cost_estimate=pl.CostEstimate(
            flops=4 * B * num_heads * S * S * dh + 2 * B * S * H * H,
            transcendentals=B * num_heads * S * S,
            bytes_accessed=3 * B * S * H * 2 + B * S * H * 4 + H * H * 2 + 3 * H * 4,
        ),
    )(q_hm, k_hm, v_hm, wd_b, bd2, g2, b2)
    return out


# --------------------------------------------------------------------------
# Parameters + pure-JAX reference
# --------------------------------------------------------------------------
def init_params(key, input_size, hidden_size):
    """Deterministic synthetic parameters. Linear weights stored as (in, out)."""
    ks = jax.random.split(key, 8)

    def lin(kw, kb, fan_in, fan_out):
        bound = 1.0 / math.sqrt(fan_in)
        w = jax.random.uniform(kw, (fan_in, fan_out), jnp.float32, -bound, bound)
        b = jax.random.uniform(kb, (fan_out,), jnp.float32, -bound, bound)
        return w, b

    wq, bq = lin(ks[0], ks[1], input_size, hidden_size)
    wk, bk = lin(ks[2], ks[3], input_size, hidden_size)
    wv, bv = lin(ks[4], ks[5], input_size, hidden_size)
    wd, bd = lin(ks[6], ks[7], hidden_size, hidden_size)
    gamma = jnp.ones((hidden_size,), jnp.float32)
    beta = jnp.zeros((hidden_size,), jnp.float32)
    return (wq, bq, wk, bk, wv, bv, wd, bd, gamma, beta)


def _reference(x, params, num_heads, eps=1e-12):
    """Pure-JAX f32 reference matching the PyTorch module (dropout = identity)."""
    wq, bq, wk, bk, wv, bv, wd, bd, gamma, beta = params
    B, S, _ = x.shape
    H = wq.shape[1]
    dh = H // num_heads

    def split_heads(t):  # (B, S, H) -> (B, nh, S, dh)
        return t.reshape(B, S, num_heads, dh).transpose(0, 2, 1, 3)

    q = split_heads(x @ wq + bq)
    k = split_heads(x @ wk + bk)
    v = split_heads(x @ wv + bv)
    scores = jnp.einsum("bhqd,bhkd->bhqk", q, k) / math.sqrt(dh)
    probs = jax.nn.softmax(scores, axis=-1)
    ctx = jnp.einsum("bhqk,bhkd->bhqd", probs, v)
    ctx = ctx.transpose(0, 2, 1, 3).reshape(B, S, H)
    hid = ctx @ wd + bd
    u = hid.mean(-1, keepdims=True)
    s = ((hid - u) ** 2).mean(-1, keepdims=True)
    normed = (hid - u) / jnp.sqrt(s + eps)
    return gamma * normed + beta


if __name__ == "__main__":
    B, S = 2, 8
    input_size = 16
    hidden_size = 32
    num_heads = 4

    key = jax.random.PRNGKey(0)
    kx, kp = jax.random.split(key)
    x = jax.random.normal(kx, (B, S, input_size), jnp.float32)
    params = init_params(kp, input_size, hidden_size)

    out = self_attention(x, params, num_heads=num_heads)
    out = jax.block_until_ready(out)

    ref = _reference(x, params, num_heads)
    assert out.shape == (B, S, hidden_size)
    # bf16 MXU operands (f32 accumulation) -> looser tolerance vs the f32 reference.
    assert jnp.allclose(out, ref, atol=5e-2, rtol=5e-2), (
        "mismatch vs reference; max abs err = %f"
        % float(jnp.max(jnp.abs(out - ref))))

    print("KERNEL_OK")
</pallas_src>

<mosaic_0001>
module attributes {stable_mosaic.version = 11 : i64} {
  func.func @_qkv_proj_kernel(%arg0: i32, %arg1: i32, %arg2: memref<1x8x16xf32, #tpu.memory_space<vmem>>, %arg3: memref<16x32xbf16, #tpu.memory_space<vmem>>, %arg4: memref<1x32xf32, #tpu.memory_space<vmem>>, %arg5: memref<16x32xbf16, #tpu.memory_space<vmem>>, %arg6: memref<1x32xf32, #tpu.memory_space<vmem>>, %arg7: memref<16x32xbf16, #tpu.memory_space<vmem>>, %arg8: memref<1x32xf32, #tpu.memory_space<vmem>>, %arg9: memref<1x4x8x8xbf16, #tpu.memory_space<vmem>>, %arg10: memref<1x4x8x8xbf16, #tpu.memory_space<vmem>>, %arg11: memref<1x4x8x8xbf16, #tpu.memory_space<vmem>>) attributes {dimension_semantics = [#tpu.dimension_semantics<parallel>, #tpu.dimension_semantics<parallel>], iteration_bounds = array<i64: 2, 1>, scalar_prefetch = 0 : i64, scratch_operands = 0 : i64, tpu.core_type = #tpu.core_type<tc>, window_params = [{transform_indices = @transform_0, window_bounds = array<i64: 1, 8, 16>}, {pipeline_mode = #tpu.pipeline_mode<synchronous>, transform_indices = @transform_1, window_bounds = array<i64: 16, 32>}, {pipeline_mode = #tpu.pipeline_mode<synchronous>, transform_indices = @transform_2, window_bounds = array<i64: 1, 32>}, {pipeline_mode = #tpu.pipeline_mode<synchronous>, transform_indices = @transform_3, window_bounds = array<i64: 16, 32>}, {pipeline_mode = #tpu.pipeline_mode<synchronous>, transform_indices = @transform_4, window_bounds = array<i64: 1, 32>}, {pipeline_mode = #tpu.pipeline_mode<synchronous>, transform_indices = @transform_5, window_bounds = array<i64: 16, 32>}, {pipeline_mode = #tpu.pipeline_mode<synchronous>, transform_indices = @transform_6, window_bounds = array<i64: 1, 32>}, {transform_indices = @transform_7, window_bounds = array<i64: 1, 4, 8, 8>}, {transform_indices = @transform_8, window_bounds = array<i64: 1, 4, 8, 8>}, {transform_indices = @transform_9, window_bounds = array<i64: 1, 4, 8, 8>}]} {
    %c0 = arith.constant 0 : index
    %c0_0 = arith.constant 0 : index
    %c0_1 = arith.constant 0 : index
    %0 = vector.load %arg2[%c0, %c0_0, %c0_1] : memref<1x8x16xf32, #tpu.memory_space<vmem>>, vector<1x8x16xf32>
    %1 = vector.shape_cast %0 : vector<1x8x16xf32> to vector<8x16xf32>
    %2 = arith.truncf %1 : vector<8x16xf32> to vector<8x16xbf16>
    %c0_2 = arith.constant 0 : index
    %c0_3 = arith.constant 0 : index
    %3 = vector.load %arg3[%c0_2, %c0_3] : memref<16x32xbf16, #tpu.memory_space<vmem>>, vector<16x32xbf16>
    %cst = arith.constant dense<0.000000e+00> : vector<8x32xf32>
    %4 = tpu.matmul %2, %3, %cst {dimension_numbers = #tpu.dot_dimension_numbers<[1], [0], [0], [1], [0, 0, 1, 1], [], []>} : vector<8x16xbf16>, vector<16x32xbf16>, vector<8x32xf32> -> vector<8x32xf32>
    %c0_4 = arith.constant 0 : index
    %c0_5 = arith.constant 0 : index
    %5 = vector.load %arg4[%c0_4, %c0_5] : memref<1x32xf32, #tpu.memory_space<vmem>>, vector<1x32xf32>
    %6 = vector.broadcast %5 : vector<1x32xf32> to vector<8x32xf32>
    %7 = arith.addf %4, %6 : vector<8x32xf32>
    %c0_6 = arith.constant 0 : index
    %c0_7 = arith.constant 0 : index
    %8 = vector.load %arg5[%c0_6, %c0_7] : memref<16x32xbf16, #tpu.memory_space<vmem>>, vector<16x32xbf16>
    %cst_8 = arith.constant dense<0.000000e+00> : vector<8x32xf32>
    %9 = tpu.matmul %2, %8, %cst_8 {dimension_numbers = #tpu.dot_dimension_numbers<[1], [0], [0], [1], [0, 0, 1, 1], [], []>} : vector<8x16xbf16>, vector<16x32xbf16>, vector<8x32xf32> -> vector<8x32xf32>
    %c0_9 = arith.constant 0 : index
    %c0_10 = arith.constant 0 : index
    %10 = vector.load %arg6[%c0_9, %c0_10] : memref<1x32xf32, #tpu.memory_space<vmem>>, vector<1x32xf32>
    %11 = vector.broadcast %10 : vector<1x32xf32> to vector<8x32xf32>
    %12 = arith.addf %9, %11 : vector<8x32xf32>
    %c0_11 = arith.constant 0 : index
    %c0_12 = arith.constant 0 : index
    %13 = vector.load %arg7[%c0_11, %c0_12] : memref<16x32xbf16, #tpu.memory_space<vmem>>, vector<16x32xbf16>
    %cst_13 = arith.constant dense<0.000000e+00> : vector<8x32xf32>
    %14 = tpu.matmul %2, %13, %cst_13 {dimension_numbers = #tpu.dot_dimension_numbers<[1], [0], [0], [1], [0, 0, 1, 1], [], []>} : vector<8x16xbf16>, vector<16x32xbf16>, vector<8x32xf32> -> vector<8x32xf32>
    %c0_14 = arith.constant 0 : index
    %c0_15 = arith.constant 0 : index
    %15 = vector.load %arg8[%c0_14, %c0_15] : memref<1x32xf32, #tpu.memory_space<vmem>>, vector<1x32xf32>
    %16 = vector.broadcast %15 : vector<1x32xf32> to vector<8x32xf32>
    %17 = arith.addf %14, %16 : vector<8x32xf32>
    %cst_16 = arith.constant 0.353553385 : f32
    %18 = vector.broadcast %cst_16 : f32 to vector<8x32xf32>
    %19 = arith.mulf %7, %18 : vector<8x32xf32>
    %20 = vector.extract_strided_slice %19 {offsets = [0, 0], sizes = [8, 8], strides = [1, 1]} : vector<8x32xf32> to vector<8x8xf32>
    %21 = arith.truncf %20 : vector<8x8xf32> to vector<8x8xbf16>
    %c0_17 = arith.constant 0 : index
    %c0_18 = arith.constant 0 : index
    %c0_19 = arith.constant 0 : index
    %c0_20 = arith.constant 0 : index
    %22 = vector.load %arg9[%c0_17, %c0_18, %c0_19, %c0_20] : memref<1x4x8x8xbf16, #tpu.memory_space<vmem>>, vector<1x1x8x8xbf16>
    %23 = vector.shape_cast %22 : vector<1x1x8x8xbf16> to vector<8x8xbf16>
    %24 = vector.shape_cast %21 : vector<8x8xbf16> to vector<1x1x8x8xbf16>
    tpu.vector_store %arg9[%c0_17, %c0_18, %c0_19, %c0_20], %24 {strides = array<i32>} : memref<1x4x8x8xbf16, #tpu.memory_space<vmem>>, vector<1x1x8x8xbf16>,
    %25 = vector.extract_strided_slice %12 {offsets = [0, 0], sizes = [8, 8], strides = [1, 1]} : vector<8x32xf32> to vector<8x8xf32>
    %26 = arith.truncf %25 : vector<8x8xf32> to vector<8x8xbf16>
    %c0_21 = arith.constant 0 : index
    %c0_22 = arith.constant 0 : index
    %c0_23 = arith.constant 0 : index
    %c0_24 = arith.constant 0 : index
    %27 = vector.load %arg10[%c0_21, %c0_22, %c0_23, %c0_24] : memref<1x4x8x8xbf16, #tpu.memory_space<vmem>>, vector<1x1x8x8xbf16>
    %28 = vector.shape_cast %27 : vector<1x1x8x8xbf16> to vector<8x8xbf16>
    %29 = vector.shape_cast %26 : vector<8x8xbf16> to vector<1x1x8x8xbf16>
    tpu.vector_store %arg10[%c0_21, %c0_22, %c0_23, %c0_24], %29 {strides = array<i32>} : memref<1x4x8x8xbf16, #tpu.memory_space<vmem>>, vector<1x1x8x8xbf16>,
    %30 = vector.extract_strided_slice %17 {offsets = [0, 0], sizes = [8, 8], strides = [1, 1]} : vector<8x32xf32> to vector<8x8xf32>
    %31 = arith.truncf %30 : vector<8x8xf32> to vector<8x8xbf16>
    %c0_25 = arith.constant 0 : index
    %c0_26 = arith.constant 0 : index
    %c0_27 = arith.constant 0 : index
    %c0_28 = arith.constant 0 : index
    %32 = vector.load %arg11[%c0_25, %c0_26, %c0_27, %c0_28] : memref<1x4x8x8xbf16, #tpu.memory_space<vmem>>, vector<1x1x8x8xbf16>
    %33 = vector.shape_cast %32 : vector<1x1x8x8xbf16> to vector<8x8xbf16>
    %34 = vector.shape_cast %31 : vector<8x8xbf16> to vector<1x1x8x8xbf16>
    tpu.vector_store %arg11[%c0_25, %c0_26, %c0_27, %c0_28], %34 {strides = array<i32>} : memref<1x4x8x8xbf16, #tpu.memory_space<vmem>>, vector<1x1x8x8xbf16>,
    %35 = vector.extract_strided_slice %19 {offsets = [0, 8], sizes = [8, 8], strides = [1, 1]} : vector<8x32xf32> to vector<8x8xf32>
    %36 = arith.truncf %35 : vector<8x8xf32> to vector<8x8xbf16>
    %c0_29 = arith.constant 0 : index
    %c1 = arith.constant 1 : index
    %c0_30 = arith.constant 0 : index
    %c0_31 = arith.constant 0 : index
    %37 = vector.load %arg9[%c0_29, %c1, %c0_30, %c0_31] : memref<1x4x8x8xbf16, #tpu.memory_space<vmem>>, vector<1x1x8x8xbf16>
    %38 = vector.shape_cast %37 : vector<1x1x8x8xbf16> to vector<8x8xbf16>
    %39 = vector.shape_cast %36 : vector<8x8xbf16> to vector<1x1x8x8xbf16>
    tpu.vector_store %arg9[%c0_29, %c1, %c0_30, %c0_31], %39 {strides = array<i32>} : memref<1x4x8x8xbf16, #tpu.memory_space<vmem>>, vector<1x1x8x8xbf16>,
    %40 = vector.extract_strided_slice %12 {offsets = [0, 8], sizes = [8, 8], strides = [1, 1]} : vector<8x32xf32> to vector<8x8xf32>
    %41 = arith.truncf %40 : vector<8x8xf32> to vector<8x8xbf16>
    %c0_32 = arith.constant 0 : index
    %c1_33 = arith.constant 1 : index
    %c0_34 = arith.constant 0 : index
    %c0_35 = arith.constant 0 : index
    %42 = vector.load %arg10[%c0_32, %c1_33, %c0_34, %c0_35] : memref<1x4x8x8xbf16, #tpu.memory_space<vmem>>, vector<1x1x8x8xbf16>
    %43 = vector.shape_cast %42 : vector<1x1x8x8xbf16> to vector<8x8xbf16>
    %44 = vector.shape_cast %41 : vector<8x8xbf16> to vector<1x1x8x8xbf16>
    tpu.vector_store %arg10[%c0_32, %c1_33, %c0_34, %c0_35], %44 {strides = array<i32>} : memref<1x4x8x8xbf16, #tpu.memory_space<vmem>>, vector<1x1x8x8xbf16>,
    %45 = vector.extract_strided_slice %17 {offsets = [0, 8], sizes = [8, 8], strides = [1, 1]} : vector<8x32xf32> to vector<8x8xf32>
    %46 = arith.truncf %45 : vector<8x8xf32> to vector<8x8xbf16>
    %c0_36 = arith.constant 0 : index
    %c1_37 = arith.constant 1 : index
    %c0_38 = arith.constant 0 : index
    %c0_39 = arith.constant 0 : index
    %47 = vector.load %arg11[%c0_36, %c1_37, %c0_38, %c0_39] : memref<1x4x8x8xbf16, #tpu.memory_space<vmem>>, vector<1x1x8x8xbf16>
    %48 = vector.shape_cast %47 : vector<1x1x8x8xbf16> to vector<8x8xbf16>
    %49 = vector.shape_cast %46 : vector<8x8xbf16> to vector<1x1x8x8xbf16>
    tpu.vector_store %arg11[%c0_36, %c1_37, %c0_38, %c0_39], %49 {strides = array<i32>} : memref<1x4x8x8xbf16, #tpu.memory_space<vmem>>, vector<1x1x8x8xbf16>,
    %50 = vector.extract_strided_slice %19 {offsets = [0, 16], sizes = [8, 8], strides = [1, 1]} : vector<8x32xf32> to vector<8x8xf32>
    %51 = arith.truncf %50 : vector<8x8xf32> to vector<8x8xbf16>
    %c0_40 = arith.constant 0 : index
    %c2 = arith.constant 2 : index
    %c0_41 = arith.constant 0 : index
    %c0_42 = arith.constant 0 : index
    %52 = vector.load %arg9[%c0_40, %c2, %c0_41, %c0_42] : memref<1x4x8x8xbf16, #tpu.memory_space<vmem>>, vector<1x1x8x8xbf16>
    %53 = vector.shape_cast %52 : vector<1x1x8x8xbf16> to vector<8x8xbf16>
    %54 = vector.shape_cast %51 : vector<8x8xbf16> to vector<1x1x8x8xbf16>
    tpu.vector_store %arg9[%c0_40, %c2, %c0_41, %c0_42], %54 {strides = array<i32>} : memref<1x4x8x8xbf16, #tpu.memory_space<vmem>>, vector<1x1x8x8xbf16>,
    %55 = vector.extract_strided_slice %12 {offsets = [0, 16], sizes = [8, 8], strides = [1, 1]} : vector<8x32xf32> to vector<8x8xf32>
    %56 = arith.truncf %55 : vector<8x8xf32> to vector<8x8xbf16>
    %c0_43 = arith.constant 0 : index
    %c2_44 = arith.constant 2 : index
    %c0_45 = arith.constant 0 : index
    %c0_46 = arith.constant 0 : index
    %57 = vector.load %arg10[%c0_43, %c2_44, %c0_45, %c0_46] : memref<1x4x8x8xbf16, #tpu.memory_space<vmem>>, vector<1x1x8x8xbf16>
    %58 = vector.shape_cast %57 : vector<1x1x8x8xbf16> to vector<8x8xbf16>
    %59 = vector.shape_cast %56 : vector<8x8xbf16> to vector<1x1x8x8xbf16>
    tpu.vector_store %arg10[%c0_43, %c2_44, %c0_45, %c0_46], %59 {strides = array<i32>} : memref<1x4x8x8xbf16, #tpu.memory_space<vmem>>, vector<1x1x8x8xbf16>,
    %60 = vector.extract_strided_slice %17 {offsets = [0, 16], sizes = [8, 8], strides = [1, 1]} : vector<8x32xf32> to vector<8x8xf32>
    %61 = arith.truncf %60 : vector<8x8xf32> to vector<8x8xbf16>
    %c0_47 = arith.constant 0 : index
    %c2_48 = arith.constant 2 : index
    %c0_49 = arith.constant 0 : index
    %c0_50 = arith.constant 0 : index
    %62 = vector.load %arg11[%c0_47, %c2_48, %c0_49, %c0_50] : memref<1x4x8x8xbf16, #tpu.memory_space<vmem>>, vector<1x1x8x8xbf16>
    %63 = vector.shape_cast %62 : vector<1x1x8x8xbf16> to vector<8x8xbf16>
    %64 = vector.shape_cast %61 : vector<8x8xbf16> to vector<1x1x8x8xbf16>
    tpu.vector_store %arg11[%c0_47, %c2_48, %c0_49, %c0_50], %64 {strides = array<i32>} : memref<1x4x8x8xbf16, #tpu.memory_space<vmem>>, vector<1x1x8x8xbf16>,
    %65 = vector.extract_strided_slice %19 {offsets = [0, 24], sizes = [8, 8], strides = [1, 1]} : vector<8x32xf32> to vector<8x8xf32>
    %66 = arith.truncf %65 : vector<8x8xf32> to vector<8x8xbf16>
    %c0_51 = arith.constant 0 : index
    %c3 = arith.constant 3 : index
    %c0_52 = arith.constant 0 : index
    %c0_53 = arith.constant 0 : index
    %67 = vector.load %arg9[%c0_51, %c3, %c0_52, %c0_53] : memref<1x4x8x8xbf16, #tpu.memory_space<vmem>>, vector<1x1x8x8xbf16>
    %68 = vector.shape_cast %67 : vector<1x1x8x8xbf16> to vector<8x8xbf16>
    %69 = vector.shape_cast %66 : vector<8x8xbf16> to vector<1x1x8x8xbf16>
    tpu.vector_store %arg9[%c0_51, %c3, %c0_52, %c0_53], %69 {strides = array<i32>} : memref<1x4x8x8xbf16, #tpu.memory_space<vmem>>, vector<1x1x8x8xbf16>,
    %70 = vector.extract_strided_slice %12 {offsets = [0, 24], sizes = [8, 8], strides = [1, 1]} : vector<8x32xf32> to vector<8x8xf32>
    %71 = arith.truncf %70 : vector<8x8xf32> to vector<8x8xbf16>
    %c0_54 = arith.constant 0 : index
    %c3_55 = arith.constant 3 : index
    %c0_56 = arith.constant 0 : index
    %c0_57 = arith.constant 0 : index
    %72 = vector.load %arg10[%c0_54, %c3_55, %c0_56, %c0_57] : memref<1x4x8x8xbf16, #tpu.memory_space<vmem>>, vector<1x1x8x8xbf16>
    %73 = vector.shape_cast %72 : vector<1x1x8x8xbf16> to vector<8x8xbf16>
    %74 = vector.shape_cast %71 : vector<8x8xbf16> to vector<1x1x8x8xbf16>
    tpu.vector_store %arg10[%c0_54, %c3_55, %c0_56, %c0_57], %74 {strides = array<i32>} : memref<1x4x8x8xbf16, #tpu.memory_space<vmem>>, vector<1x1x8x8xbf16>,
    %75 = vector.extract_strided_slice %17 {offsets = [0, 24], sizes = [8, 8], strides = [1, 1]} : vector<8x32xf32> to vector<8x8xf32>
    %76 = arith.truncf %75 : vector<8x8xf32> to vector<8x8xbf16>
    %c0_58 = arith.constant 0 : index
    %c3_59 = arith.constant 3 : index
    %c0_60 = arith.constant 0 : index
    %c0_61 = arith.constant 0 : index
    %77 = vector.load %arg11[%c0_58, %c3_59, %c0_60, %c0_61] : memref<1x4x8x8xbf16, #tpu.memory_space<vmem>>, vector<1x1x8x8xbf16>
    %78 = vector.shape_cast %77 : vector<1x1x8x8xbf16> to vector<8x8xbf16>
    %79 = vector.shape_cast %76 : vector<8x8xbf16> to vector<1x1x8x8xbf16>
    tpu.vector_store %arg11[%c0_58, %c3_59, %c0_60, %c0_61], %79 {strides = array<i32>} : memref<1x4x8x8xbf16, #tpu.memory_space<vmem>>, vector<1x1x8x8xbf16>,
    return
  }
  func.func @transform_0(%arg0: i32, %arg1: i32) -> (i32, i32, i32) {
    %c0_i32 = arith.constant 0 : i32
    %c0_i32_0 = arith.constant 0 : i32
    return %arg0, %arg1, %c0_i32 : i32, i32, i32
  }
  func.func @transform_1(%arg0: i32, %arg1: i32) -> (i32, i32) {
    %c0_i32 = arith.constant 0 : i32
    %c0_i32_0 = arith.constant 0 : i32
    %c0_i32_1 = arith.constant 0 : i32
    return %c0_i32, %c0_i32_0 : i32, i32
  }
  func.func @transform_2(%arg0: i32, %arg1: i32) -> (i32, i32) {
    %c0_i32 = arith.constant 0 : i32
    %c0_i32_0 = arith.constant 0 : i32
    %c0_i32_1 = arith.constant 0 : i32
    return %c0_i32, %c0_i32_0 : i32, i32
  }
  func.func @transform_3(%arg0: i32, %arg1: i32) -> (i32, i32) {
    %c0_i32 = arith.constant 0 : i32
    %c0_i32_0 = arith.constant 0 : i32
    %c0_i32_1 = arith.constant 0 : i32
    return %c0_i32, %c0_i32_0 : i32, i32
  }
  func.func @transform_4(%arg0: i32, %arg1: i32) -> (i32, i32) {
    %c0_i32 = arith.constant 0 : i32
    %c0_i32_0 = arith.constant 0 : i32
    %c0_i32_1 = arith.constant 0 : i32
    return %c0_i32, %c0_i32_0 : i32, i32
  }
  func.func @transform_5(%arg0: i32, %arg1: i32) -> (i32, i32) {
    %c0_i32 = arith.constant 0 : i32
    %c0_i32_0 = arith.constant 0 : i32
    %c0_i32_1 = arith.constant 0 : i32
    return %c0_i32, %c0_i32_0 : i32, i32
  }
  func.func @transform_6(%arg0: i32, %arg1: i32) -> (i32, i32) {
    %c0_i32 = arith.constant 0 : i32
    %c0_i32_0 = arith.constant 0 : i32
    %c0_i32_1 = arith.constant 0 : i32
    return %c0_i32, %c0_i32_0 : i32, i32
  }
  func.func @transform_7(%arg0: i32, %arg1: i32) -> (i32, i32, i32, i32) {
    %c0_i32 = arith.constant 0 : i32
    %c0_i32_0 = arith.constant 0 : i32
    %c0_i32_1 = arith.constant 0 : i32
    return %arg0, %c0_i32, %arg1, %c0_i32_0 : i32, i32, i32, i32
  }
  func.func @transform_8(%arg0: i32, %arg1: i32) -> (i32, i32, i32, i32) {
    %c0_i32 = arith.constant 0 : i32
    %c0_i32_0 = arith.constant 0 : i32
    %c0_i32_1 = arith.constant 0 : i32
    return %arg0, %c0_i32, %arg1, %c0_i32_0 : i32, i32, i32, i32
  }
  func.func @transform_9(%arg0: i32, %arg1: i32) -> (i32, i32, i32, i32) {
    %c0_i32 = arith.constant 0 : i32
    %c0_i32_0 = arith.constant 0 : i32
    %c0_i32_1 = arith.constant 0 : i32
    return %arg0, %c0_i32, %arg1, %c0_i32_0 : i32, i32, i32, i32
  }
}

</mosaic_0001>

<llo_original>
// kernel: tpu_custom_call.1
$region0: #{tpu_custom_call.1}
  #allocation0 [shape = 'u32[]', space=smem, size = 0x4, offset = 0x4, fixed_abs, tag = 'smem constant byte address 0x4 - core index']
  #allocation1 [shape = 'u32[144,128]{1,0:T(1,128)}', space=vmem, size = 0x12000, scoped, tag = 'internal scratch']
  %s0 = inlined_call_operand.hbm [shape: f32[2,8,16], index: 0, kind: input, shape index: {}]
  %s1 = inlined_call_operand.hbm [shape: bf16[16,32], index: 1, kind: input, shape index: {}]
  %s2 = inlined_call_operand.vmem [shape: f32[1,32], index: 2, kind: input, shape index: {}]
  %s3 = inlined_call_operand.hbm [shape: bf16[16,32], index: 3, kind: input, shape index: {}]
  %s4 = inlined_call_operand.hbm [shape: f32[1,32], index: 4, kind: input, shape index: {}]
  %s5 = inlined_call_operand.vmem [shape: bf16[16,32], index: 5, kind: input, shape index: {}]
  %s6 = inlined_call_operand.vmem [shape: f32[1,32], index: 6, kind: input, shape index: {}]
  %s7 = inlined_call_operand.hbm [shape: bf16[2,4,8,8], index: 7, kind: output, shape index: {0}]
  %s8 = inlined_call_operand.hbm [shape: bf16[2,4,8,8], index: 8, kind: output, shape index: {1}]
  %s9 = inlined_call_operand.hbm [shape: bf16[2,4,8,8], index: 9, kind: output, shape index: {2}]
  %10 = xla_tuple %s7, %s8, %s9
  %s11 = sld [smem:[#allocation0]]
  $region93: #{tpu_custom_call.1} parent=0
    _
  %s13 = ssub.s32 1, %s11
  %s14 = scalar_select 0, %s13, %s11
  $region1: #{tpu_custom_call.1} parent=0
    #allocation2 [shape = 'u8[8192]{0}', space=vmem, size = 0x2000, scoped, tag = 'input window, operand 0']
    #allocation3 [shape = 's32[2]{0}', space=sflag, size = 0x8, scoped, tag = 'scoped memory for tpu_custom_call.1']
    #allocation4 [shape = 's32[2]{0}', space=sflag, size = 0x8, scoped, tag = 'scoped memory for tpu_custom_call.1']
    #allocation5 [shape = 'u8[4096]{0}', space=vmem, size = 0x1000, scoped, tag = 'input window, operand 1, single buffered']
    #allocation6 [shape = 's32[1]{0}', space=sflag, size = 0x4, scoped, tag = 'scoped memory for tpu_custom_call.1']
    #allocation7 [shape = 'u8[4096]{0}', space=vmem, size = 0x1000, scoped, tag = 'input window, operand 3, single buffered']
    #allocation8 [shape = 'u8[512]{0}', space=vmem, size = 0x400, scoped, tag = 'input window, operand 4, single buffered']
    #allocation9 [shape = 's32[1]{0}', space=sflag, size = 0x4, scoped, tag = 'scoped memory for tpu_custom_call.1']
    #allocation10 [shape = 'u8[16384]{0}', space=vmem, size = 0x4000, scoped, tag = 'output window, operand 0']
    #allocation11 [shape = 'u8[16384]{0}', space=vmem, size = 0x4000, scoped, tag = 'output window, operand 1']
    #allocation12 [shape = 's32[2]{0}', space=sflag, size = 0x8, scoped, tag = 'scoped memory for tpu_custom_call.1']
    #allocation13 [shape = 'u8[16384]{0}', space=vmem, size = 0x4000, scoped, tag = 'output window, operand 2']
    %15 = vsyncpa [#allocation3], 0
    %s16 = scalar_lea.sflag [#allocation3], 1
    %17 = vsyncpa %s16, 0
    %18 = vsyncpa [#allocation6], 0
    %19 = vsyncpa [#allocation9], 0
    %20 = vsyncpa [#allocation4], 0
    %s21 = scalar_lea.sflag [#allocation4], 1
    %22 = vsyncpa %s21, 0
    %23 = vsyncpa [#allocation12], 0
    %s24 = scalar_lea.sflag [#allocation12], 1
    %25 = vsyncpa %s24, 0
    loop: start=0, step=1, limit=4
    $region2: #{tpu_custom_call.1} parent=1 // loop_pre_header
      _
    $region3: #{tpu_custom_call.1} parent=1 // loop_header
      %s27 = sphi 0, %s31
      %p28 = scmp.ge.s32.totalorder %s27, 4
      %s34 = sphi 0, %s46
      %s35 = sphi 0, %s42
      %s36 = sphi 0, %s34
      %s37 = sphi 0, %s35
      %s38 = sphi 0, %s36
      %s39 = sphi 0, %s37
      %s51 = sphi 0, %s53
      %s54 = sphi 0, %s51
      %s55 = sphi 0, %s54
      %s71 = sphi 0, %s55
      %s75 = sphi 0, %s75
      %s77 = sphi 0, %s75
      %s78 = sphi 0, %s77
      %s92 = sphi 0, %s78
      %s96 = sphi 0, %s96
      %s98 = sphi 0, %s96
      %s99 = sphi 0, %s98
      %s113 = sphi 0, %s99
      %s117 = sphi 0, %s117
      %s119 = sphi 0, %s117
      %s120 = sphi 0, %s119
      %s134 = sphi 0, %s120
      %s138 = sphi 0, %s138
      %s140 = sphi 0, %s138
      %s141 = sphi 0, %s140
      %s155 = sphi 0, %s141
      %s159 = sphi 0, %s159
      %s161 = sphi 0, %s159
      %s162 = sphi 0, %s161
      %s176 = sphi 0, %s162
      %s180 = sphi 0, %s180
      %s182 = sphi 0, %s180
      %s183 = sphi 0, %s182
      %s197 = sphi 0, %s183
      %s205 = sphi 0, %s207
      %s208 = sphi 0, %s205
      %s209 = sphi 0, %s208
      %s225 = sphi 0, %s209
      %s233 = sphi 0, %s235
      %s236 = sphi 0, %s233
      %s237 = sphi 0, %s236
      %s253 = sphi 0, %s237
      %s261 = sphi 0, %s263
      %s264 = sphi 0, %s261
      %s265 = sphi 0, %s264
      %s281 = sphi 0, %s265
    $region4: #{tpu_custom_call.1} parent=1 // loop_header_branch
      %30 = sbr.rel (%p28) target = $region8
    $region5: #{tpu_custom_call.1} parent=1 // loop_body
      %s32 = ssub.s32 %s27, 1
      %s33 = ssub.s32 %s27, 2
      %s40 = sadd.s32 1, %s35
      %p41 = scmp.ge.s32.totalorder %s40, 1
      %s42 = scalar_select %p41, 0, %s40
      %s43 = sadd.s32 1, %s34
      %s44 = scalar_select %p41, %s43, %s34
      %p45 = scmp.ge.s32.totalorder %s44, 2
      %s46 = scalar_select %p45, 0, %s44
      %s47 = ssub.s32 %s34, %s46
      %s48 = ssub.s32 %s35, %s42
      %s49 = sor.u32 %s47, %s48
      %p50 = scmp.eq.s32.totalorder %s49, 0
      %s52 = sadd.s32 %s51, 1
      %s53 = scalar_select %p50, %s51, %s52
      %p56 = pneg %p50
      %p57 = scmp.eq.s32.totalorder %s27, 1
      %p58 = por %p56, %p57
      %p59 = scmp.ne.s32.totalorder %s51, %s54
      %p60 = scmp.eq.s32.totalorder %s27, 0
      %p61 = por %p59, %p60
      %p62 = scmp.ne.s32.totalorder %s51, %s54
      %p63 = scmp.eq.s32.totalorder %s32, 1
      %p64 = por %p62, %p63
      %p65 = scmp.ne.s32.totalorder %s54, %s55
      %p66 = scmp.eq.s32.totalorder %s32, 0
      %p67 = por %p65, %p66
      %p68 = scmp.ne.s32.totalorder %s54, %s55
      %p69 = scmp.eq.s32.totalorder %s33, 1
      %p70 = por %p68, %p69
      %p72 = scmp.ne.s32.totalorder %s55, %s71
      %p73 = scmp.eq.s32.totalorder %s33, 0
      %p74 = por %p72, %p73
      %s76 = sadd.s32 %s75, 1
      %p79 = scmp.eq.s32.totalorder %s27, 1
      %p80 = scmp.ne.s32.totalorder %s75, %s77
      %p81 = scmp.eq.s32.totalorder %s27, 0
      %p82 = por %p80, %p81
      %p83 = scmp.ne.s32.totalorder %s75, %s77
      %p84 = scmp.eq.s32.totalorder %s32, 1
      %p85 = por %p83, %p84
      %p86 = scmp.ne.s32.totalorder %s77, %s78
      %p87 = scmp.eq.s32.totalorder %s32, 0
      %p88 = por %p86, %p87
      %p89 = scmp.ne.s32.totalorder %s77, %s78
      %p90 = scmp.eq.s32.totalorder %s33, 1
      %p91 = por %p89, %p90
      %p93 = scmp.ne.s32.totalorder %s78, %s92
      %p94 = scmp.eq.s32.totalorder %s33, 0
      %p95 = por %p93, %p94
      %s97 = sadd.s32 %s96, 1
      %p100 = scmp.eq.s32.totalorder %s27, 1
      %p101 = scmp.ne.s32.totalorder %s96, %s98
      %p102 = scmp.eq.s32.totalorder %s27, 0
      %p103 = por %p101, %p102
      %p104 = scmp.ne.s32.totalorder %s96, %s98
      %p105 = scmp.eq.s32.totalorder %s32, 1
      %p106 = por %p104, %p105
      %p107 = scmp.ne.s32.totalorder %s98, %s99
      %p108 = scmp.eq.s32.totalorder %s32, 0
      %p109 = por %p107, %p108
      %p110 = scmp.ne.s32.totalorder %s98, %s99
      %p111 = scmp.eq.s32.totalorder %s33, 1
      %p112 = por %p110, %p111
      %p114 = scmp.ne.s32.totalorder %s99, %s113
      %p115 = scmp.eq.s32.totalorder %s33, 0
      %p116 = por %p114, %p115
      %s118 = sadd.s32 %s117, 1
      %p121 = scmp.eq.s32.totalorder %s27, 1
      %p122 = scmp.ne.s32.totalorder %s117, %s119
      %p123 = scmp.eq.s32.totalorder %s27, 0
      %p124 = por %p122, %p123
      %p125 = scmp.ne.s32.totalorder %s117, %s119
      %p126 = scmp.eq.s32.totalorder %s32, 1
      %p127 = por %p125, %p126
      %p128 = scmp.ne.s32.totalorder %s119, %s120
      %p129 = scmp.eq.s32.totalorder %s32, 0
      %p130 = por %p128, %p129
      %p131 = scmp.ne.s32.totalorder %s119, %s120
      %p132 = scmp.eq.s32.totalorder %s33, 1
      %p133 = por %p131, %p132
      %p135 = scmp.ne.s32.totalorder %s120, %s134
      %p136 = scmp.eq.s32.totalorder %s33, 0
      %p137 = por %p135, %p136
      %s139 = sadd.s32 %s138, 1
      %p142 = scmp.eq.s32.totalorder %s27, 1
      %p143 = scmp.ne.s32.totalorder %s138, %s140
      %p144 = scmp.eq.s32.totalorder %s27, 0
      %p145 = por %p143, %p144
      %p146 = scmp.ne.s32.totalorder %s138, %s140
      %p147 = scmp.eq.s32.totalorder %s32, 1
      %p148 = por %p146, %p147
      %p149 = scmp.ne.s32.totalorder %s140, %s141
      %p150 = scmp.eq.s32.totalorder %s32, 0
      %p151 = por %p149, %p150
      %p152 = scmp.ne.s32.totalorder %s140, %s141
      %p153 = scmp.eq.s32.totalorder %s33, 1
      %p154 = por %p152, %p153
      %p156 = scmp.ne.s32.totalorder %s141, %s155
      %p157 = scmp.eq.s32.totalorder %s33, 0
      %p158 = por %p156, %p157
      %s160 = sadd.s32 %s159, 1
      %p163 = scmp.eq.s32.totalorder %s27, 1
      %p164 = scmp.ne.s32.totalorder %s159, %s161
      %p165 = scmp.eq.s32.totalorder %s27, 0
      %p166 = por %p164, %p165
      %p167 = scmp.ne.s32.totalorder %s159, %s161
      %p168 = scmp.eq.s32.totalorder %s32, 1
      %p169 = por %p167, %p168
      %p170 = scmp.ne.s32.totalorder %s161, %s162
      %p171 = scmp.eq.s32.totalorder %s32, 0
      %p172 = por %p170, %p171
      %p173 = scmp.ne.s32.totalorder %s161, %s162
      %p174 = scmp.eq.s32.totalorder %s33, 1
      %p175 = por %p173, %p174
      %p177 = scmp.ne.s32.totalorder %s162, %s176
      %p178 = scmp.eq.s32.totalorder %s33, 0
      %p179 = por %p177, %p178
      %s181 = sadd.s32 %s180, 1
      %p184 = scmp.eq.s32.totalorder %s27, 1
      %p185 = scmp.ne.s32.totalorder %s180, %s182
      %p186 = scmp.eq.s32.totalorder %s27, 0
      %p187 = por %p185, %p186
      %p188 = scmp.ne.s32.totalorder %s180, %s182
      %p189 = scmp.eq.s32.totalorder %s32, 1
      %p190 = por %p188, %p189
      %p191 = scmp.ne.s32.totalorder %s182, %s183
      %p192 = scmp.eq.s32.totalorder %s32, 0
      %p193 = por %p191, %p192
      %p194 = scmp.ne.s32.totalorder %s182, %s183
      %p195 = scmp.eq.s32.totalorder %s33, 1
      %p196 = por %p194, %p195
      %p198 = scmp.ne.s32.totalorder %s183, %s197
      %p199 = scmp.eq.s32.totalorder %s33, 0
      %p200 = por %p198, %p199
      %s201 = ssub.s32 %s34, %s46
      %s202 = ssub.s32 %s35, %s42
      %s203 = sor.u32 %s201, %s202
      %p204 = scmp.eq.s32.totalorder %s203, 0
      %s206 = sadd.s32 %s205, 1
      %s207 = scalar_select %p204, %s205, %s206
      %p210 = pneg %p204
      %p211 = scmp.eq.s32.totalorder %s27, 1
      %p212 = por %p210, %p211
      %p213 = scmp.ne.s32.totalorder %s205, %s208
      %p214 = scmp.eq.s32.totalorder %s27, 0
      %p215 = por %p213, %p214
      %p216 = scmp.ne.s32.totalorder %s205, %s208
      %p217 = scmp.eq.s32.totalorder %s32, 1
      %p218 = por %p216, %p217
      %p219 = scmp.ne.s32.totalorder %s208, %s209
      %p220 = scmp.eq.s32.totalorder %s32, 0
      %p221 = por %p219, %p220
      %p222 = scmp.ne.s32.totalorder %s208, %s209
      %p223 = scmp.eq.s32.totalorder %s33, 1
      %p224 = por %p222, %p223
      %p226 = scmp.ne.s32.totalorder %s209, %s225
      %p227 = scmp.eq.s32.totalorder %s33, 0
      %p228 = por %p226, %p227
      %s229 = ssub.s32 %s34, %s46
      %s230 = ssub.s32 %s35, %s42
      %s231 = sor.u32 %s229, %s230
      %p232 = scmp.eq.s32.totalorder %s231, 0
      %s234 = sadd.s32 %s233, 1
      %s235 = scalar_select %p232, %s233, %s234
      %p238 = pneg %p232
      %p239 = scmp.eq.s32.totalorder %s27, 1
      %p240 = por %p238, %p239
      %p241 = scmp.ne.s32.totalorder %s233, %s236
      %p242 = scmp.eq.s32.totalorder %s27, 0
      %p243 = por %p241, %p242
      %p244 = scmp.ne.s32.totalorder %s233, %s236
      %p245 = scmp.eq.s32.totalorder %s32, 1
      %p246 = por %p244, %p245
      %p247 = scmp.ne.s32.totalorder %s236, %s237
      %p248 = scmp.eq.s32.totalorder %s32, 0
      %p249 = por %p247, %p248
      %p250 = scmp.ne.s32.totalorder %s236, %s237
      %p251 = scmp.eq.s32.totalorder %s33, 1
      %p252 = por %p250, %p251
      %p254 = scmp.ne.s32.totalorder %s237, %s253
      %p255 = scmp.eq.s32.totalorder %s33, 0
      %p256 = por %p254, %p255
      %s257 = ssub.s32 %s34, %s46
      %s258 = ssub.s32 %s35, %s42
      %s259 = sor.u32 %s257, %s258
      %p260 = scmp.eq.s32.totalorder %s259, 0
      %s262 = sadd.s32 %s261, 1
      %s263 = scalar_select %p260, %s261, %s262
      %p266 = pneg %p260
      %p267 = scmp.eq.s32.totalorder %s27, 1
      %p268 = por %p266, %p267
      %p269 = scmp.ne.s32.totalorder %s261, %s264
      %p270 = scmp.eq.s32.totalorder %s27, 0
      %p271 = por %p269, %p270
      %p272 = scmp.ne.s32.totalorder %s261, %s264
      %p273 = scmp.eq.s32.totalorder %s32, 1
      %p274 = por %p272, %p273
      %p275 = scmp.ne.s32.totalorder %s264, %s265
      %p276 = scmp.eq.s32.totalorder %s32, 0
      %p277 = por %p275, %p276
      %p278 = scmp.ne.s32.totalorder %s264, %s265
      %p279 = scmp.eq.s32.totalorder %s33, 1
      %p280 = por %p278, %p279
      %p282 = scmp.ne.s32.totalorder %s265, %s281
      %p283 = scmp.eq.s32.totalorder %s33, 0
      %p284 = por %p282, %p283
      %p285 = scmp.le.s32.totalorder 1, %s27
      %p286 = scmp.lt.s32.totalorder %s27, 3
      %p287 = pnand %p285, %p286
      %p288 = pneg %p287
      // Predicated region
      $region9: #{tpu_custom_call.1} parent=5 // pred_check
        _
      $region10: #{tpu_custom_call.1} parent=5 // pred_check_branch
        %290 = sbr.rel (%p287) target = $region12
      $region11: #{tpu_custom_call.1} parent=5 // pred_region
        %s291 = ssub.s32 %s27, 1
        // Predicated region
        $region13: #{tpu_custom_call.1} parent=11 // pred_check
          %p292 = pneg %p88
        $region14: #{tpu_custom_call.1} parent=11 // pred_check_branch
          %294 = sbr.rel (%p292) target = $region16
        $region15: #{tpu_custom_call.1} parent=11 // pred_region
          %s296 = ssub.s32 128, 128
          %297 = vsyncadd [#allocation6], %s296
          %s298 = sshll.u32 [#allocation5], 4
          %s299 = int_to_ptr.vmem [resolvable:$true] %s298
          %304 = dma.hbm_to_vmem [thread:$0]  %s1, 128, %s299, [#allocation6], 64, 64, 4
        $region16: #{tpu_custom_call.1} parent=11 // pred_fallthru
          _
        // Predicated region
        $region17: #{tpu_custom_call.1} parent=11 // pred_check
          %p305 = pneg %p109
        $region18: #{tpu_custom_call.1} parent=11 // pred_check_branch
          %307 = sbr.rel (%p305) target = $region20
        $region19: #{tpu_custom_call.1} parent=11 // pred_region
          _
        $region20: #{tpu_custom_call.1} parent=11 // pred_fallthru
          _
        // Predicated region
        $region21: #{tpu_custom_call.1} parent=11 // pred_check
          %p308 = pneg %p130
        $region22: #{tpu_custom_call.1} parent=11 // pred_check_branch
          %310 = sbr.rel (%p308) target = $region24
        $region23: #{tpu_custom_call.1} parent=11 // pred_region
          %s312 = ssub.s32 128, 128
          %313 = vsyncadd [#allocation6], %s312
          %s314 = sshll.u32 [#allocation7], 4
          %s315 = int_to_ptr.vmem [resolvable:$true] %s314
          %320 = dma.hbm_to_vmem [thread:$0]  %s3, 128, %s315, [#allocation6], 64, 64, 4
        $region24: #{tpu_custom_call.1} parent=11 // pred_fallthru
          _
        // Predicated region
        $region25: #{tpu_custom_call.1} parent=11 // pred_check
          %p321 = pneg %p151
        $region26: #{tpu_custom_call.1} parent=11 // pred_check_branch
          %323 = sbr.rel (%p321) target = $region28
        $region27: #{tpu_custom_call.1} parent=11 // pred_region
          %s325 = ssub.s32 16, 16
          %326 = vsyncadd [#allocation9], %s325
          %s328 = sshll.u32 [#allocation8], 4
          %s329 = int_to_ptr.vmem [resolvable:$true] %s328
          %331 = dma.hbm_to_vmem [thread:$0]  %s4, 16, %s329, [#allocation9]
        $region28: #{tpu_custom_call.1} parent=11 // pred_fallthru
          _
        // Predicated region
        $region29: #{tpu_custom_call.1} parent=11 // pred_check
          %p332 = pneg %p172
        $region30: #{tpu_custom_call.1} parent=11 // pred_check_branch
          %334 = sbr.rel (%p332) target = $region32
        $region31: #{tpu_custom_call.1} parent=11 // pred_region
          _
        $region32: #{tpu_custom_call.1} parent=11 // pred_fallthru
          _
        // Predicated region
        $region33: #{tpu_custom_call.1} parent=11 // pred_check
          %p335 = pneg %p193
        $region34: #{tpu_custom_call.1} parent=11 // pred_check_branch
          %337 = sbr.rel (%p335) target = $region36
        $region35: #{tpu_custom_call.1} parent=11 // pred_region
          _
        $region36: #{tpu_custom_call.1} parent=11 // pred_fallthru
          _
      $region12: #{tpu_custom_call.1} parent=5 // pred_fallthru
        _
      %p338 = scmp.lt.s32.totalorder %s27, 2
      // Predicated region
      $region37: #{tpu_custom_call.1} parent=5 // pred_check
        %p339 = pneg %p338
      $region38: #{tpu_custom_call.1} parent=5 // pred_check_branch
        %341 = sbr.rel (%p339) target = $region40
      $region39: #{tpu_custom_call.1} parent=5 // pred_region
        // Predicated region
        $region41: #{tpu_custom_call.1} parent=39 // pred_check
          %p342 = pneg %p61
        $region42: #{tpu_custom_call.1} parent=39 // pred_check_branch
          %344 = sbr.rel (%p342) target = $region44
        $region43: #{tpu_custom_call.1} parent=39 // pred_region
          %s345 = sand.u32 %s51, 1
          %s346 = scalar_lea.sflag [#allocation3], %s345
          %s347 = sand.u32 %s51, 1
          %s348 = smul.addr %s347, 8
          %s349 = scalar_lea.vmem [#allocation2], %s348
          %s351 = ssub.s32 128, 128
          %352 = vsyncadd %s346, %s351
          %s353 = sadd.s32 %s35, %s34
          %s354 = smul.addr %s353, 128
          %s355 = scalar_lea.hbm %s0, %s354
          %s357 = sshll.u32 %s349, 4
          %s358 = int_to_ptr.vmem [resolvable:$true] %s357
          %360 = dma.hbm_to_vmem [thread:$0]  %s355, 128, %s358, %s346
        $region44: #{tpu_custom_call.1} parent=39 // pred_fallthru
          _
      $region40: #{tpu_custom_call.1} parent=5 // pred_fallthru
        _
      %p361 = scmp.le.s32.totalorder 1, %s27
      %p362 = scmp.lt.s32.totalorder %s27, 3
      %p363 = pnand %p361, %p362
      %p364 = pneg %p363
      // Predicated region
      $region45: #{tpu_custom_call.1} parent=5 // pred_check
        _
      $region46: #{tpu_custom_call.1} parent=5 // pred_check_branch
        %366 = sbr.rel (%p363) target = $region48
      $region47: #{tpu_custom_call.1} parent=5 // pred_region
        %s367 = ssub.s32 %s27, 1
        %s368 = sand.u32 %s54, 1
        %s369 = scalar_lea.sflag [#allocation3], %s368
        %s370 = sand.u32 %s54, 1
        %s371 = smul.addr %s370, 8
        %s372 = scalar_lea.vmem [#allocation2], %s371
        // Predicated region
        $region49: #{tpu_custom_call.1} parent=47 // pred_check
          %p373 = pneg %p67
        $region50: #{tpu_custom_call.1} parent=47 // pred_check_branch
          %375 = sbr.rel (%p373) target = $region52
        $region51: #{tpu_custom_call.1} parent=47 // pred_region
          %376 = dma.done %s369, 128
        $region52: #{tpu_custom_call.1} parent=47 // pred_fallthru
          _
        // Predicated region
        $region53: #{tpu_custom_call.1} parent=47 // pred_check
          %p377 = pneg %p88
        $region54: #{tpu_custom_call.1} parent=47 // pred_check_branch
          %379 = sbr.rel (%p377) target = $region56
        $region55: #{tpu_custom_call.1} parent=47 // pred_region
          %380 = dma.done [#allocation6], 128
        $region56: #{tpu_custom_call.1} parent=47 // pred_fallthru
          _
        // Predicated region
        $region57: #{tpu_custom_call.1} parent=47 // pred_check
          %p381 = pneg %p130
        $region58: #{tpu_custom_call.1} parent=47 // pred_check_branch
          %383 = sbr.rel (%p381) target = $region60
        $region59: #{tpu_custom_call.1} parent=47 // pred_region
          %384 = dma.done [#allocation6], 128
        $region60: #{tpu_custom_call.1} parent=47 // pred_fallthru
          _
        // Predicated region
        $region61: #{tpu_custom_call.1} parent=47 // pred_check
          %p385 = pneg %p151
        $region62: #{tpu_custom_call.1} parent=47 // pred_check_branch
          %387 = sbr.rel (%p385) target = $region64
        $region63: #{tpu_custom_call.1} parent=47 // pred_region
          %388 = dma.done [#allocation9], 16
        $region64: #{tpu_custom_call.1} parent=47 // pred_fallthru
          _
        %s389 = sand.u32 %s54, 1
        %s390 = scalar_lea.sflag [#allocation3], %s389
        %s391 = sand.u32 %s54, 1
        %s392 = smul.addr %s391, 8
        %s393 = scalar_lea.vmem [#allocation2], %s392
        %p394 = pneg %p67
        %p395 = pneg %p64
        %p396 = pneg %p88
        %p397 = pneg %p85
        %p398 = pneg %p109
        %p399 = pneg %p106
        %p400 = pneg %p130
        %p401 = pneg %p127
        %p402 = pneg %p151
        %p403 = pneg %p148
        %p404 = pneg %p172
        %p405 = pneg %p169
        %p406 = pneg %p193
        %p407 = pneg %p190
        %p408 = pneg %p221
        %p409 = pneg %p218
        %s410 = sand.u32 %s208, 1
        %s411 = scalar_lea.sflag [#allocation4], %s410
        %s412 = sand.u32 %s208, 1
        %s413 = smul.addr %s412, 16
        %s414 = scalar_lea.vmem [#allocation10], %s413
        %p415 = pneg %p249
        %p416 = pneg %p246
        %s417 = sand.u32 %s32, 1
        %s418 = scalar_lea.sflag [#allocation12], %s417
        %s419 = sand.u32 %s236, 1
        %s420 = smul.addr %s419, 16
        %s421 = scalar_lea.vmem [#allocation11], %s420
        %p422 = pneg %p277
        %p423 = pneg %p274
        %s424 = sand.u32 %s32, 1
        %s425 = scalar_lea.sflag [#allocation12], %s424
        %s426 = sand.u32 %s264, 1
        %s427 = smul.addr %s426, 16
        %s428 = scalar_lea.vmem [#allocation13], %s427
        %v430 = vld [vmem:[%s372] sm:$0xff]
        %v431 = vpack.c.bf16 %v430, %v430
        %v432 = vld [vmem:[#allocation5] sm:$0xf]
        %v433 = vld [vmem:[#allocation5 + $0x4] sm:$0xf]
        %v434 = vld [vmem:[%s2] sm:$0x1]
        %v436 = vlaneseq
        %v437 = vshrl.u32 %v436, 7
        %v438 = vsub.s32 0, %v437
        %v439 = vrot.slane %v434, %v438
        %v443 = vunpack.c.l.b16 %v432
        %v444 = vunpack.c.l.b16 %v433
        %v445 = vpack.c.b16 %v444, %v443
        %vm447 = vcmask 130048
        %v449 = vsel %vm447, %v431, 0
        %451 = vmatprep.subr.bf16.mxu0 0
        %452 = vmatpush1.bf16.msra.mxu0 0
        %453 = vmatprep.subr.bf16.mxu0 0
        %454 = vmatpush1.bf16.msra.mxu0 0
        %455 = vmatprep.subr.bf16.mxu0 0
        %456 = vmatpush1.bf16.msra.mxu0 0
        %457 = vmatprep.subr.bf16.mxu0 0
        %458 = vmatpush1.bf16.msra.mxu0 0
        %459 = vmatprep.subr.bf16.mxu0 0
        %460 = vmatpush1.bf16.msra.mxu0 0
        %461 = vmatprep.subr.bf16.mxu0 0
        %462 = vmatpush1.bf16.msra.mxu0 0
        %463 = vmatprep.subr.bf16.mxu0 0
        %464 = vmatpush1.bf16.msra.mxu0 0
        %465 = vmatprep.subr.bf16.mxu0 0
        %466 = vmatpush1.bf16.msra.mxu0 %v445
        %467 = vmatprep.subr.bf16.mxu0 0
        %468 = vmatpush2.bf16.msra.mxu0 0
        %469 = vmatprep.subr.bf16.mxu0 0
        %470 = vmatpush2.bf16.msra.mxu0 0
        %471 = vmatprep.subr.bf16.mxu0 0
        %472 = vmatpush2.bf16.msra.mxu0 0
        %473 = vmatprep.subr.bf16.mxu0 0
        %474 = vmatpush2.bf16.msra.mxu0 0
        %475 = vmatprep.subr.bf16.mxu0 0
        %476 = vmatpush2.bf16.msra.mxu0 0
        %477 = vmatprep.subr.bf16.mxu0 0
        %478 = vmatpush2.bf16.msra.mxu0 0
        %479 = vmatprep.subr.bf16.mxu0 0
        %480 = vmatpush2.bf16.msra.mxu0 0
        %481 = vmatprep.subr.bf16.mxu0 0
        %482 = vmatpush2.bf16.msra.mxu0 0
        %483 = vmatprep.mubr.bf16.mxu0 0
        %484 = vmatmul.mubr.bf16.gmra.mxu0 %v449
        %v485 = vpop.f32.mrf.mxu0
        %v486 = vadd.f32 %v439, %v485
        %v487 = vpop.f32.mrf.mxu0
        %v488 = vpop.f32.mrf.mxu0
        %v489 = vpop.f32.mrf.mxu0
        %490 = vdwg.mxu0
        %v491 = vld [vmem:[#allocation7] sm:$0xf]
        %v492 = vld [vmem:[#allocation7 + $0x4] sm:$0xf]
        %v493 = vld [vmem:[#allocation8] sm:$0x1]
        %v495 = vlaneseq
        %v496 = vshrl.u32 %v495, 7
        %v497 = vsub.s32 0, %v496
        %v498 = vrot.slane %v493, %v497
        %v502 = vunpack.c.l.b16 %v491
        %v503 = vunpack.c.l.b16 %v492
        %v504 = vpack.c.b16 %v503, %v502
        %506 = vmatprep.subr.bf16.mxu0 0
        %507 = vmatpush1.bf16.msra.mxu0 0
        %508 = vmatprep.subr.bf16.mxu0 0
        %509 = vmatpush1.bf16.msra.mxu0 0
        %510 = vmatprep.subr.bf16.mxu0 0
        %511 = vmatpush1.bf16.msra.mxu0 0
        %512 = vmatprep.subr.bf16.mxu0 0
        %513 = vmatpush1.bf16.msra.mxu0 0
        %514 = vmatprep.subr.bf16.mxu0 0
        %515 = vmatpush1.bf16.msra.mxu0 0
        %516 = vmatprep.subr.bf16.mxu0 0
        %517 = vmatpush1.bf16.msra.mxu0 0
        %518 = vmatprep.subr.bf16.mxu0 0
        %519 = vmatpush1.bf16.msra.mxu0 0
        %520 = vmatprep.subr.bf16.mxu0 0
        %521 = vmatpush1.bf16.msra.mxu0 %v504
        %522 = vmatprep.subr.bf16.mxu0 0
        %523 = vmatpush2.bf16.msra.mxu0 0
        %524 = vmatprep.subr.bf16.mxu0 0
        %525 = vmatpush2.bf16.msra.mxu0 0
        %526 = vmatprep.subr.bf16.mxu0 0
        %527 = vmatpush2.bf16.msra.mxu0 0
        %528 = vmatprep.subr.bf16.mxu0 0
        %529 = vmatpush2.bf16.msra.mxu0 0
        %530 = vmatprep.subr.bf16.mxu0 0
        %531 = vmatpush2.bf16.msra.mxu0 0
        %532 = vmatprep.subr.bf16.mxu0 0
        %533 = vmatpush2.bf16.msra.mxu0 0
        %534 = vmatprep.subr.bf16.mxu0 0
        %535 = vmatpush2.bf16.msra.mxu0 0
        %536 = vmatprep.subr.bf16.mxu0 0
        %537 = vmatpush2.bf16.msra.mxu0 0
        %538 = vmatprep.mubr.bf16.mxu0 0
        %539 = vmatmul.mubr.bf16.gmra.mxu0 %v449
        %v540 = vpop.f32.mrf.mxu0
        %v541 = vadd.f32 %v498, %v540
        %v542 = vpop.f32.mrf.mxu0
        %v543 = vpop.f32.mrf.mxu0
        %v544 = vpop.f32.mrf.mxu0
        %545 = vdwg.mxu0
        %v546 = vld [vmem:[%s5] sm:$0xf]
        %v547 = vld [vmem:[%s5 + $0x4] sm:$0xf]
        %v548 = vld [vmem:[%s6] sm:$0x1]
        %v550 = vlaneseq
        %v551 = vshrl.u32 %v550, 7
        %v552 = vsub.s32 0, %v551
        %v553 = vrot.slane %v548, %v552
        %v557 = vunpack.c.l.b16 %v546
        %v558 = vunpack.c.l.b16 %v547
        %v559 = vpack.c.b16 %v558, %v557
        %561 = vmatprep.subr.bf16.mxu0 0
        %562 = vmatpush1.bf16.msra.mxu0 0
        %563 = vmatprep.subr.bf16.mxu0 0
        %564 = vmatpush1.bf16.msra.mxu0 0
        %565 = vmatprep.subr.bf16.mxu0 0
        %566 = vmatpush1.bf16.msra.mxu0 0
        %567 = vmatprep.subr.bf16.mxu0 0
        %568 = vmatpush1.bf16.msra.mxu0 0
        %569 = vmatprep.subr.bf16.mxu0 0
        %570 = vmatpush1.bf16.msra.mxu0 0
        %571 = vmatprep.subr.bf16.mxu0 0
        %572 = vmatpush1.bf16.msra.mxu0 0
        %573 = vmatprep.subr.bf16.mxu0 0
        %574 = vmatpush1.bf16.msra.mxu0 0
        %575 = vmatprep.subr.bf16.mxu0 0
        %576 = vmatpush1.bf16.msra.mxu0 %v559
        %577 = vmatprep.subr.bf16.mxu0 0
        %578 = vmatpush2.bf16.msra.mxu0 0
        %579 = vmatprep.subr.bf16.mxu0 0
        %580 = vmatpush2.bf16.msra.mxu0 0
        %581 = vmatprep.subr.bf16.mxu0 0
        %582 = vmatpush2.bf16.msra.mxu0 0
        %583 = vmatprep.subr.bf16.mxu0 0
        %584 = vmatpush2.bf16.msra.mxu0 0
        %585 = vmatprep.subr.bf16.mxu0 0
        %586 = vmatpush2.bf16.msra.mxu0 0
        %587 = vmatprep.subr.bf16.mxu0 0
        %588 = vmatpush2.bf16.msra.mxu0 0
        %589 = vmatprep.subr.bf16.mxu0 0
        %590 = vmatpush2.bf16.msra.mxu0 0
        %591 = vmatprep.subr.bf16.mxu0 0
        %592 = vmatpush2.bf16.msra.mxu0 0
        %593 = vmatprep.mubr.bf16.mxu0 0
        %594 = vmatmul.mubr.bf16.gmra.mxu0 %v449
        %v595 = vpop.f32.mrf.mxu0
        %v596 = vadd.f32 %v553, %v595
        %v597 = vpop.f32.mrf.mxu0
        %v598 = vpop.f32.mrf.mxu0
        %v599 = vpop.f32.mrf.mxu0
        %600 = vdwg.mxu0
        %v601 = vmul.f32 %v486, 0.35355338
        %v602 = vpack.c.bf16 %v601, %v601
        %vm603 = vcmask 60416
        %604 = vst.msk [vmem:[%s414] sm:$0xf] %vm603, %v602
        %v605 = vpack.c.bf16 %v541, %v541
        %606 = vst.msk [vmem:[%s421] sm:$0xf] %vm603, %v605
        %v607 = vpack.c.bf16 %v596, %v596
        %608 = vst.msk [vmem:[%s428] sm:$0xf] %vm603, %v607
        %v610 = vunpack.c.l.b16 %v602
        %v611 = vpack.c.b16 %v610, %v610
        %612 = vrot.lane.b32.xlu0 %v611, 120
        %v613 = vpop.permute.xlu0 %612
        %s615 = scalar_lea.vmem %s414, 4 [#allocation10]
        %616 = vst.msk [vmem:[%s615] sm:$0xf] %vm603, %v613
        %v618 = vunpack.c.l.b16 %v605
        %v619 = vpack.c.b16 %v618, %v618
        %620 = vrot.lane.b32.xlu0 %v619, 120
        %v621 = vpop.permute.xlu0 %620
        %s623 = scalar_lea.vmem %s421, 4 [#allocation11]
        %624 = vst.msk [vmem:[%s623] sm:$0xf] %vm603, %v621
        %v626 = vunpack.c.l.b16 %v607
        %v627 = vpack.c.b16 %v626, %v626
        %628 = vrot.lane.b32.xlu0 %v627, 120
        %v629 = vpop.permute.xlu0 %628
        %s631 = scalar_lea.vmem %s428, 4 [#allocation13]
        %632 = vst.msk [vmem:[%s631] sm:$0xf] %vm603, %v629
        %633 = vrot.lane.b32.xlu0 %v611, 112
        %v634 = vpop.permute.xlu0 %633
        %s636 = scalar_lea.vmem %s414, 8 [#allocation10]
        %637 = vst.msk [vmem:[%s636] sm:$0xf] %vm603, %v634
        %638 = vrot.lane.b32.xlu0 %v619, 112
        %v639 = vpop.permute.xlu0 %638
        %s641 = scalar_lea.vmem %s421, 8 [#allocation11]
        %642 = vst.msk [vmem:[%s641] sm:$0xf] %vm603, %v639
        %643 = vrot.lane.b32.xlu0 %v627, 112
        %v644 = vpop.permute.xlu0 %643
        %s646 = scalar_lea.vmem %s428, 8 [#allocation13]
        %647 = vst.msk [vmem:[%s646] sm:$0xf] %vm603, %v644
        %648 = vrot.lane.b32.xlu0 %v611, 104
        %v649 = vpop.permute.xlu0 %648
        %s651 = scalar_lea.vmem %s414, 12 [#allocation10]
        %652 = vst.msk [vmem:[%s651] sm:$0xf] %vm603, %v649
        %653 = vrot.lane.b32.xlu0 %v619, 104
        %v654 = vpop.permute.xlu0 %653
        %s656 = scalar_lea.vmem %s421, 12 [#allocation11]
        %657 = vst.msk [vmem:[%s656] sm:$0xf] %vm603, %v654
        %658 = vrot.lane.b32.xlu0 %v627, 104
        %v659 = vpop.permute.xlu0 %658
        %s661 = scalar_lea.vmem %s428, 12 [#allocation13]
        %662 = vst.msk [vmem:[%s661] sm:$0xf] %vm603, %v659
        %s663 = sand.u32 %s208, 1
        %s664 = scalar_lea.sflag [#allocation4], %s663
        %s665 = sand.u32 %s208, 1
        %s666 = smul.addr %s665, 16
        %s667 = scalar_lea.vmem [#allocation10], %s666
        %s668 = sand.u32 %s32, 1
        %s669 = scalar_lea.sflag [#allocation12], %s668
        %s670 = sand.u32 %s236, 1
        %s671 = smul.addr %s670, 16
        %s672 = scalar_lea.vmem [#allocation11], %s671
        %s673 = sand.u32 %s32, 1
        %s674 = scalar_lea.sflag [#allocation12], %s673
        %s675 = sand.u32 %s264, 1
        %s676 = smul.addr %s675, 16
        %s677 = scalar_lea.vmem [#allocation13], %s676
        // Predicated region
        $region65: #{tpu_custom_call.1} parent=47 // pred_check
          %p678 = pneg %p218
        $region66: #{tpu_custom_call.1} parent=47 // pred_check_branch
          %680 = sbr.rel (%p678) target = $region68
        $region67: #{tpu_custom_call.1} parent=47 // pred_region
          %s682 = ssub.s32 256, 256
          %683 = vsyncadd %s664, %s682
          %s684 = smul.addr %s36, 4
          %s685 = sadd.s32 %s37, %s684
          %s686 = smul.addr %s685, 64
          %s687 = scalar_lea.hbm %s7, %s686
          %s688 = sshll.u32 %s667, 4
          %s689 = int_to_ptr.vmem [resolvable:$true] %s688
          %694 = dma.vmem_to_hbm [thread:$0]  %s689, 256, %s687, %s664, 64, 64, 4
        $region68: #{tpu_custom_call.1} parent=47 // pred_fallthru
          _
        // Predicated region
        $region69: #{tpu_custom_call.1} parent=47 // pred_check
          %p695 = pneg %p246
        $region70: #{tpu_custom_call.1} parent=47 // pred_check_branch
          %697 = sbr.rel (%p695) target = $region72
        $region71: #{tpu_custom_call.1} parent=47 // pred_region
          %s699 = ssub.s32 256, 256
          %700 = vsyncadd %s669, %s699
          %s701 = smul.addr %s36, 4
          %s702 = sadd.s32 %s37, %s701
          %s703 = smul.addr %s702, 64
          %s704 = scalar_lea.hbm %s8, %s703
          %s705 = sshll.u32 %s672, 4
          %s706 = int_to_ptr.vmem [resolvable:$true] %s705
          %711 = dma.vmem_to_hbm [thread:$0]  %s706, 256, %s704, %s669, 64, 64, 4
        $region72: #{tpu_custom_call.1} parent=47 // pred_fallthru
          _
        // Predicated region
        $region73: #{tpu_custom_call.1} parent=47 // pred_check
          %p712 = pneg %p274
        $region74: #{tpu_custom_call.1} parent=47 // pred_check_branch
          %714 = sbr.rel (%p712) target = $region76
        $region75: #{tpu_custom_call.1} parent=47 // pred_region
          %s716 = ssub.s32 256, 256
          %717 = vsyncadd %s674, %s716
          %s718 = smul.addr %s36, 4
          %s719 = sadd.s32 %s37, %s718
          %s720 = smul.addr %s719, 64
          %s721 = scalar_lea.hbm %s9, %s720
          %s722 = sshll.u32 %s677, 4
          %s723 = int_to_ptr.vmem [resolvable:$true] %s722
          %728 = dma.vmem_to_hbm [thread:$0]  %s723, 256, %s721, %s674, 64, 64, 4
        $region76: #{tpu_custom_call.1} parent=47 // pred_fallthru
          _
      $region48: #{tpu_custom_call.1} parent=5 // pred_fallthru
        _
      %p729 = scmp.le.s32.totalorder 2, %s27
      // Predicated region
      $region77: #{tpu_custom_call.1} parent=5 // pred_check
        %p730 = pneg %p729
      $region78: #{tpu_custom_call.1} parent=5 // pred_check_branch
        %732 = sbr.rel (%p730) target = $region80
      $region79: #{tpu_custom_call.1} parent=5 // pred_region
        %s733 = ssub.s32 %s27, 2
        // Predicated region
        $region81: #{tpu_custom_call.1} parent=79 // pred_check
          %p734 = pneg %p224
        $region82: #{tpu_custom_call.1} parent=79 // pred_check_branch
          %736 = sbr.rel (%p734) target = $region84
        $region83: #{tpu_custom_call.1} parent=79 // pred_region
          %s737 = sand.u32 %s209, 1
          %s738 = scalar_lea.sflag [#allocation4], %s737
          %s739 = sand.u32 %s209, 1
          %s740 = smul.addr %s739, 16
          %s741 = scalar_lea.vmem [#allocation10], %s740
          %742 = dma.done %s738, 256
        $region84: #{tpu_custom_call.1} parent=79 // pred_fallthru
          _
        // Predicated region
        $region85: #{tpu_custom_call.1} parent=79 // pred_check
          %p743 = pneg %p252
        $region86: #{tpu_custom_call.1} parent=79 // pred_check_branch
          %745 = sbr.rel (%p743) target = $region88
        $region87: #{tpu_custom_call.1} parent=79 // pred_region
          %s746 = sand.u32 %s33, 1
          %s747 = scalar_lea.sflag [#allocation12], %s746
          %s748 = sand.u32 %s237, 1
          %s749 = smul.addr %s748, 16
          %s750 = scalar_lea.vmem [#allocation11], %s749
          %751 = dma.done %s747, 256
        $region88: #{tpu_custom_call.1} parent=79 // pred_fallthru
          _
        // Predicated region
        $region89: #{tpu_custom_call.1} parent=79 // pred_check
          %p752 = pneg %p280
        $region90: #{tpu_custom_call.1} parent=79 // pred_check_branch
          %754 = sbr.rel (%p752) target = $region92
        $region91: #{tpu_custom_call.1} parent=79 // pred_region
          %s755 = sand.u32 %s33, 1
          %s756 = scalar_lea.sflag [#allocation12], %s755
          %s757 = sand.u32 %s265, 1
          %s758 = smul.addr %s757, 16
          %s759 = scalar_lea.vmem [#allocation13], %s758
          %760 = dma.done %s756, 256
        $region92: #{tpu_custom_call.1} parent=79 // pred_fallthru
          _
      $region80: #{tpu_custom_call.1} parent=5 // pred_fallthru
        _
    $region6: #{tpu_custom_call.1} parent=1 // loop_footer
      %s31 = sadd.s32 1, %s27
    $region7: #{tpu_custom_call.1} parent=1 // loop_footer_branch
      %26 = sbr.rel target = $region3
    $region8: #{tpu_custom_call.1} parent=1 // loop_exit
      _
    %761 = vsyncpa [#allocation3], 1
    %s762 = scalar_lea.sflag [#allocation3], 1
    %763 = vsyncpa %s762, 1
    %764 = vsyncpa [#allocation6], 1
    %765 = vsyncpa [#allocation9], 1
    %766 = vsyncpa [#allocation4], 1
    %s767 = scalar_lea.sflag [#allocation4], 1
    %768 = vsyncpa %s767, 1
    %769 = vsyncpa [#allocation12], 1
    %s770 = scalar_lea.sflag [#allocation12], 1
    %771 = vsyncpa %s770, 1

</llo_original>
